<compile_context>
chip_gen: v5e
topology: v5e:2x2
jax: 0.10.0
libtpu: 0.0.40
codegen_flags: <defaults>
</compile_context>

<pallas_src>
import functools

import jax
import jax.numpy as jnp
from jax.experimental import pallas as pl
from jax.experimental.pallas import tpu as pltpu

IN_FEATURES = 3
HIDDEN_FEATURES = 3
OUT_FEATURES = 1

LANE = 128          # TPU lane width (last-dim alignment)
TB_DEFAULT = 1024   # batch-tile width (lanes per grid step); multiple of 128


def _round_up(n, m):
    return ((n + m - 1) // m) * m


def _mlp_kernel(w1_ref, w2_ref, xt_ref, o_ref):
    """VPU evaluation of y = relu(x @ W1^T) @ W2^T on a transposed layout.

    w1_ref: SMEM (3, 3) f32, w1_ref[k, j] = linear1.weight[j, k]  (in x out)
    w2_ref: SMEM (3,)   f32, w2_ref[k]    = linear2.weight[0, k]
    xt_ref: VMEM (3, TB)     x^T tile: features on sublanes, batch on lanes
    o_ref:  VMEM (1, TB)     lane-dense output tile (one row of y^T)
    """
    x0 = xt_ref[0:1, :]
    x1 = xt_ref[1:2, :]
    x2 = xt_ref[2:3, :]

    acc = jnp.zeros_like(x0)
    for j in range(HIDDEN_FEATURES):                       # static unroll (3)
        h_j = x0 * w1_ref[0, j] + x1 * w1_ref[1, j] + x2 * w1_ref[2, j]
        h_j = jnp.maximum(h_j, 0.0)                        # ReLU on the VPU
        acc = acc + h_j * w2_ref[j]
    o_ref[...] = acc


@functools.partial(jax.jit, static_argnames=("tb",))
def mymodel_forward(x, w1, w2, tb=TB_DEFAULT):
    """x: (B, 3) f32; w1 = linear1.weight (3, 3); w2 = linear2.weight (1, 3).

    Returns y = relu(x @ w1.T) @ w2.T with shape (B, 1).
    """
    B = x.shape[0]
    # Batch tile: largest multiple of 128 that is <= tb and covers B.
    tile = min(tb, _round_up(B, LANE))
    Bp = _round_up(B, tile)
    grid = Bp // tile

    # Transposed, lane-dense input layout (batch on lanes). Zero tail padding of
    # the batch is exact for matmul+ReLU and is sliced away below.
    xt = jnp.zeros((IN_FEATURES, Bp), jnp.float32).at[:, :B].set(
        x.astype(jnp.float32).T)

    # 9 + 3 weight scalars -> SMEM (no 128x128 padded weight tiles / DMAs).
    w1t = w1.astype(jnp.float32).T                             # (in=3, out=3)
    w2v = w2.astype(jnp.float32).reshape(HIDDEN_FEATURES)      # (3,)

    out_t = pl.pallas_call(
        _mlp_kernel,
        out_shape=jax.ShapeDtypeStruct((OUT_FEATURES, Bp), jnp.float32),
        grid=(grid,),
        in_specs=[
            pl.BlockSpec(memory_space=pltpu.MemorySpace.SMEM),    # w1t (3,3)
            pl.BlockSpec(memory_space=pltpu.MemorySpace.SMEM),    # w2v (3,)
            pl.BlockSpec((IN_FEATURES, tile), lambda i: (0, i)),  # x^T tile
        ],
        out_specs=pl.BlockSpec((OUT_FEATURES, tile), lambda i: (0, i)),
        compiler_params=pltpu.CompilerParams(
            dimension_semantics=("parallel",)),
        cost_estimate=pl.CostEstimate(
            flops=B * (2 * IN_FEATURES * HIDDEN_FEATURES
                       + HIDDEN_FEATURES
                       + 2 * HIDDEN_FEATURES * OUT_FEATURES),
            transcendentals=0,
            bytes_accessed=B * (IN_FEATURES + OUT_FEATURES) * 4,
        ),
    )(w1t, w2v, xt)

    # (1, Bp) row-major == (Bp, 1) row-major: slice + reshape is layout-free.
    return out_t[0, :B].reshape(B, OUT_FEATURES)


def _init_linear_weight(key, out_f, in_f):
    # Deterministic init mimicking nn.Linear's uniform(-1/sqrt(in), 1/sqrt(in)).
    bound = 1.0 / jnp.sqrt(jnp.float32(in_f))
    return jax.random.uniform(key, (out_f, in_f), jnp.float32, -bound, bound)


if __name__ == "__main__":
    key = jax.random.PRNGKey(0)
    kx, k1, k2, kx2 = jax.random.split(key, 4)

    w1 = _init_linear_weight(k1, HIDDEN_FEATURES, IN_FEATURES)   # (3, 3)
    w2 = _init_linear_weight(k2, OUT_FEATURES, HIDDEN_FEATURES)  # (1, 3)

    # Small shape consistent with the module: batch=8, features=3.
    x = jax.random.normal(kx, (8, IN_FEATURES), jnp.float32)
    out = mymodel_forward(x, w1, w2)
    jax.block_until_ready(out)
    ref = jnp.maximum(x @ w1.T, 0.0) @ w2.T
    assert out.shape == (8, OUT_FEATURES)
    assert jnp.allclose(out, ref, atol=1e-5, rtol=1e-5)

    # Exercise the batch-tiled grid (grid > 1) with a small tile.
    x2 = jax.random.normal(kx2, (300, IN_FEATURES), jnp.float32)
    out2 = mymodel_forward(x2, w1, w2, tb=128)   # tile=128 -> grid=(3,)
    jax.block_until_ready(out2)
    ref2 = jnp.maximum(x2 @ w1.T, 0.0) @ w2.T
    assert out2.shape == (300, OUT_FEATURES)
    assert jnp.allclose(out2, ref2, atol=1e-5, rtol=1e-5)

    print("KERNEL_OK")
</pallas_src>

<mosaic_0001>
module attributes {stable_mosaic.version = 11 : i64} {
  func.func @_mlp_kernel(%arg0: i32, %arg1: memref<3x3xf32, #tpu.memory_space<smem>>, %arg2: memref<3xf32, #tpu.memory_space<smem>>, %arg3: memref<3x128xf32, #tpu.memory_space<vmem>>, %arg4: memref<1x128xf32, #tpu.memory_space<vmem>>) attributes {dimension_semantics = [#tpu.dimension_semantics<parallel>], iteration_bounds = array<i64: 1>, scalar_prefetch = 0 : i64, scratch_operands = 0 : i64, tpu.core_type = #tpu.core_type<tc>, window_params = [{transform_indices = @transform_0, window_bounds = array<i64: 3, 3>}, {transform_indices = @transform_1, window_bounds = array<i64: 3>}, {transform_indices = @transform_2, window_bounds = array<i64: 3, 128>}, {transform_indices = @transform_3, window_bounds = array<i64: 1, 128>}]} {
    %c0 = arith.constant 0 : index
    %c0_0 = arith.constant 0 : index
    %0 = vector.load %arg3[%c0, %c0_0] : memref<3x128xf32, #tpu.memory_space<vmem>>, vector<1x128xf32>
    %c1 = arith.constant 1 : index
    %c0_1 = arith.constant 0 : index
    %1 = vector.load %arg3[%c1, %c0_1] : memref<3x128xf32, #tpu.memory_space<vmem>>, vector<1x128xf32>
    %c2 = arith.constant 2 : index
    %c0_2 = arith.constant 0 : index
    %2 = vector.load %arg3[%c2, %c0_2] : memref<3x128xf32, #tpu.memory_space<vmem>>, vector<1x128xf32>
    %cst = arith.constant 0.000000e+00 : f32
    %3 = vector.broadcast %cst : f32 to vector<1x128xf32>
    %c0_3 = arith.constant 0 : index
    %c0_4 = arith.constant 0 : index
    %4 = memref.load %arg1[%c0_3, %c0_4] : memref<3x3xf32, #tpu.memory_space<smem>>
    %5 = vector.broadcast %4 : f32 to vector<1x128xf32>
    %6 = arith.mulf %0, %5 : vector<1x128xf32>
    %c1_5 = arith.constant 1 : index
    %c0_6 = arith.constant 0 : index
    %7 = memref.load %arg1[%c1_5, %c0_6] : memref<3x3xf32, #tpu.memory_space<smem>>
    %8 = vector.broadcast %7 : f32 to vector<1x128xf32>
    %9 = arith.mulf %1, %8 : vector<1x128xf32>
    %10 = arith.addf %6, %9 : vector<1x128xf32>
    %c2_7 = arith.constant 2 : index
    %c0_8 = arith.constant 0 : index
    %11 = memref.load %arg1[%c2_7, %c0_8] : memref<3x3xf32, #tpu.memory_space<smem>>
    %12 = vector.broadcast %11 : f32 to vector<1x128xf32>
    %13 = arith.mulf %2, %12 : vector<1x128xf32>
    %14 = arith.addf %10, %13 : vector<1x128xf32>
    %cst_9 = arith.constant 0.000000e+00 : f32
    %15 = vector.broadcast %cst_9 : f32 to vector<1x128xf32>
    %16 = arith.maximumf %14, %15 : vector<1x128xf32>
    %c0_10 = arith.constant 0 : index
    %17 = memref.load %arg2[%c0_10] : memref<3xf32, #tpu.memory_space<smem>>
    %18 = vector.broadcast %17 : f32 to vector<1x128xf32>
    %19 = arith.mulf %16, %18 : vector<1x128xf32>
    %20 = arith.addf %3, %19 : vector<1x128xf32>
    %c0_11 = arith.constant 0 : index
    %c1_12 = arith.constant 1 : index
    %21 = memref.load %arg1[%c0_11, %c1_12] : memref<3x3xf32, #tpu.memory_space<smem>>
    %22 = vector.broadcast %21 : f32 to vector<1x128xf32>
    %23 = arith.mulf %0, %22 : vector<1x128xf32>
    %c1_13 = arith.constant 1 : index
    %c1_14 = arith.constant 1 : index
    %24 = memref.load %arg1[%c1_13, %c1_14] : memref<3x3xf32, #tpu.memory_space<smem>>
    %25 = vector.broadcast %24 : f32 to vector<1x128xf32>
    %26 = arith.mulf %1, %25 : vector<1x128xf32>
    %27 = arith.addf %23, %26 : vector<1x128xf32>
    %c2_15 = arith.constant 2 : index
    %c1_16 = arith.constant 1 : index
    %28 = memref.load %arg1[%c2_15, %c1_16] : memref<3x3xf32, #tpu.memory_space<smem>>
    %29 = vector.broadcast %28 : f32 to vector<1x128xf32>
    %30 = arith.mulf %2, %29 : vector<1x128xf32>
    %31 = arith.addf %27, %30 : vector<1x128xf32>
    %cst_17 = arith.constant 0.000000e+00 : f32
    %32 = vector.broadcast %cst_17 : f32 to vector<1x128xf32>
    %33 = arith.maximumf %31, %32 : vector<1x128xf32>
    %c1_18 = arith.constant 1 : index
    %34 = memref.load %arg2[%c1_18] : memref<3xf32, #tpu.memory_space<smem>>
    %35 = vector.broadcast %34 : f32 to vector<1x128xf32>
    %36 = arith.mulf %33, %35 : vector<1x128xf32>
    %37 = arith.addf %20, %36 : vector<1x128xf32>
    %c0_19 = arith.constant 0 : index
    %c2_20 = arith.constant 2 : index
    %38 = memref.load %arg1[%c0_19, %c2_20] : memref<3x3xf32, #tpu.memory_space<smem>>
    %39 = vector.broadcast %38 : f32 to vector<1x128xf32>
    %40 = arith.mulf %0, %39 : vector<1x128xf32>
    %c1_21 = arith.constant 1 : index
    %c2_22 = arith.constant 2 : index
    %41 = memref.load %arg1[%c1_21, %c2_22] : memref<3x3xf32, #tpu.memory_space<smem>>
    %42 = vector.broadcast %41 : f32 to vector<1x128xf32>
    %43 = arith.mulf %1, %42 : vector<1x128xf32>
    %44 = arith.addf %40, %43 : vector<1x128xf32>
    %c2_23 = arith.constant 2 : index
    %c2_24 = arith.constant 2 : index
    %45 = memref.load %arg1[%c2_23, %c2_24] : memref<3x3xf32, #tpu.memory_space<smem>>
    %46 = vector.broadcast %45 : f32 to vector<1x128xf32>
    %47 = arith.mulf %2, %46 : vector<1x128xf32>
    %48 = arith.addf %44, %47 : vector<1x128xf32>
    %cst_25 = arith.constant 0.000000e+00 : f32
    %49 = vector.broadcast %cst_25 : f32 to vector<1x128xf32>
    %50 = arith.maximumf %48, %49 : vector<1x128xf32>
    %c2_26 = arith.constant 2 : index
    %51 = memref.load %arg2[%c2_26] : memref<3xf32, #tpu.memory_space<smem>>
    %52 = vector.broadcast %51 : f32 to vector<1x128xf32>
    %53 = arith.mulf %50, %52 : vector<1x128xf32>
    %54 = arith.addf %37, %53 : vector<1x128xf32>
    %c0_27 = arith.constant 0 : index
    %c0_28 = arith.constant 0 : index
    %55 = vector.load %arg4[%c0_27, %c0_28] : memref<1x128xf32, #tpu.memory_space<vmem>>, vector<1x128xf32>
    tpu.vector_store %arg4[%c0_27, %c0_28], %54 {strides = array<i32>} : memref<1x128xf32, #tpu.memory_space<vmem>>, vector<1x128xf32>,
    return
  }
  func.func @transform_0(%arg0: i32) -> (i32, i32) {
    %c0_i32 = arith.constant 0 : i32
    %c0_i32_0 = arith.constant 0 : i32
    %c0_i32_1 = arith.constant 0 : i32
    return %c0_i32, %c0_i32_0 : i32, i32
  }
  func.func @transform_1(%arg0: i32) -> i32 {
    %c0_i32 = arith.constant 0 : i32
    %c0_i32_0 = arith.constant 0 : i32
    return %c0_i32 : i32
  }
  func.func @transform_2(%arg0: i32) -> (i32, i32) {
    %c0_i32 = arith.constant 0 : i32
    %c0_i32_0 = arith.constant 0 : i32
    return %c0_i32, %arg0 : i32, i32
  }
  func.func @transform_3(%arg0: i32) -> (i32, i32) {
    %c0_i32 = arith.constant 0 : i32
    %c0_i32_0 = arith.constant 0 : i32
    return %c0_i32, %arg0 : i32, i32
  }
}

</mosaic_0001>

<llo_original>
// kernel: mymodel_forward.1
$region0: #{mymodel_forward.1}
  #allocation0 [shape = 'u32[]', space=smem, size = 0x4, offset = 0x4, fixed_abs, tag = 'smem constant byte address 0x4 - core index']
  #allocation1 [shape = 'u32[72,128]{1,0:T(1,128)}', space=vmem, size = 0x9000, scoped, tag = 'internal scratch']
  %s0 = inlined_call_operand.vmem [shape: f32[3,3], index: 0, kind: input, shape index: {}]
  %s1 = inlined_call_operand.vmem [shape: f32[3], index: 1, kind: input, shape index: {}]
  %s2 = inlined_call_operand.vmem [shape: f32[3,128], index: 2, kind: input, shape index: {}]
  %s3 = inlined_call_operand.vmem [shape: f32[1,128], index: 3, kind: output, shape index: {}]
  %s4 = sld [smem:[#allocation0]]
  $region30: #{mymodel_forward.1} parent=0
    _
  %s6 = ssub.s32 1, %s4
  %s7 = scalar_select 0, %s6, %s4
  $region1: #{mymodel_forward.1} parent=0
    #allocation2 [shape = 'u8[2048]{0}', space=smem, size = 0x800, scoped, tag = 'input window, operand 0, single buffered']
    #allocation3 [shape = 's32[1]{0}', space=sflag, size = 0x4, scoped, tag = 'scoped memory for mymodel_forward.1']
    #allocation4 [shape = 'u8[512]{0}', space=smem, size = 0x200, scoped, tag = 'input window, operand 1, single buffered']
    #allocation5 [shape = 's32[1]{0}', space=sflag, size = 0x4, scoped, tag = 'scoped memory for mymodel_forward.1']
    %8 = vsyncpa [#allocation3], 0
    %9 = vsyncpa [#allocation5], 0
    // Predicated region
    $region2: #{mymodel_forward.1} parent=1 // pred_check
      _
    $region3: #{mymodel_forward.1} parent=1 // pred_check_branch
      %11 = sbr.rel (0) target = $region5
    $region4: #{mymodel_forward.1} parent=1 // pred_region
      %13 = vsyncadd [#allocation3], 0
      %s15 = sshll.u32 %s0, 4
      %s16 = int_to_ptr.vmem [resolvable:$true] %s15
      %18 = dma.vmem_to_smem %s16, 64, [#allocation2], [#allocation3]
    $region5: #{mymodel_forward.1} parent=1 // pred_fallthru
      _
    // Predicated region
    $region6: #{mymodel_forward.1} parent=1 // pred_check
      _
    $region7: #{mymodel_forward.1} parent=1 // pred_check_branch
      %20 = sbr.rel (0) target = $region9
    $region8: #{mymodel_forward.1} parent=1 // pred_region
      %22 = vsyncadd [#allocation5], 0
      %s24 = sshll.u32 %s1, 4
      %s25 = int_to_ptr.vmem [resolvable:$true] %s24
      %27 = dma.vmem_to_smem %s25, 16, [#allocation4], [#allocation5]
    $region9: #{mymodel_forward.1} parent=1 // pred_fallthru
      _
    // Predicated region
    $region10: #{mymodel_forward.1} parent=1 // pred_check
      _
    $region11: #{mymodel_forward.1} parent=1 // pred_check_branch
      %29 = sbr.rel (0) target = $region13
    $region12: #{mymodel_forward.1} parent=1 // pred_region
      _
    $region13: #{mymodel_forward.1} parent=1 // pred_fallthru
      _
    // Predicated region
    $region14: #{mymodel_forward.1} parent=1 // pred_check
      _
    $region15: #{mymodel_forward.1} parent=1 // pred_check_branch
      %31 = sbr.rel (0) target = $region17
    $region16: #{mymodel_forward.1} parent=1 // pred_region
      %33 = dma.done [#allocation3], 64
    $region17: #{mymodel_forward.1} parent=1 // pred_fallthru
      _
    // Predicated region
    $region18: #{mymodel_forward.1} parent=1 // pred_check
      _
    $region19: #{mymodel_forward.1} parent=1 // pred_check_branch
      %35 = sbr.rel (0) target = $region21
    $region20: #{mymodel_forward.1} parent=1 // pred_region
      %37 = dma.done [#allocation5], 16
    $region21: #{mymodel_forward.1} parent=1 // pred_fallthru
      _
    %38 = sfence
    %v39 = vld [vmem:[%s2] sm:$0x1]
    %v40 = vld [vmem:[%s2 + $0x1] sm:$0x1]
    %v41 = vld [vmem:[%s2 + $0x2] sm:$0x1]
    %s42 = sld [smem:[#allocation2]]
    %v43 = vstv %s42
    %v44 = vmul.f32 %v39, %v43
    %s45 = sld [smem:[#allocation2 + $0x80]]
    %v46 = vstv %s45
    %v47 = vmul.f32 %v40, %v46
    %v48 = vadd.f32 %v44, %v47
    %s49 = sld [smem:[#allocation2 + $0x100]]
    %v50 = vstv %s49
    %v51 = vmul.f32 %v41, %v50
    %v52 = vadd.f32 %v48, %v51
    %v53 = vmax.f32 %v52, 0.0
    %s54 = sld [smem:[#allocation4]]
    %v55 = vstv %s54
    %v56 = vmul.f32 %v53, %v55
    %v57 = vadd.f32 %v56, 0.0
    %s58 = sld [smem:[#allocation2 + $0x1]]
    %v59 = vstv %s58
    %v60 = vmul.f32 %v39, %v59
    %s61 = sld [smem:[#allocation2 + $0x81]]
    %v62 = vstv %s61
    %v63 = vmul.f32 %v40, %v62
    %v64 = vadd.f32 %v60, %v63
    %s65 = sld [smem:[#allocation2 + $0x101]]
    %v66 = vstv %s65
    %v67 = vmul.f32 %v41, %v66
    %v68 = vadd.f32 %v64, %v67
    %v69 = vmax.f32 %v68, 0.0
    %s70 = sld [smem:[#allocation4 + $0x1]]
    %v71 = vstv %s70
    %v72 = vmul.f32 %v69, %v71
    %v73 = vadd.f32 %v57, %v72
    %s74 = sld [smem:[#allocation2 + $0x2]]
    %v75 = vstv %s74
    %v76 = vmul.f32 %v39, %v75
    %s77 = sld [smem:[#allocation2 + $0x82]]
    %v78 = vstv %s77
    %v79 = vmul.f32 %v40, %v78
    %v80 = vadd.f32 %v76, %v79
    %s81 = sld [smem:[#allocation2 + $0x102]]
    %v82 = vstv %s81
    %v83 = vmul.f32 %v41, %v82
    %v84 = vadd.f32 %v80, %v83
    %v85 = vmax.f32 %v84, 0.0
    %s86 = sld [smem:[#allocation4 + $0x2]]
    %v87 = vstv %s86
    %v88 = vmul.f32 %v85, %v87
    %v89 = vadd.f32 %v73, %v88
    %90 = vst [vmem:[%s3] sm:$0x1] %v89
    // Predicated region
    $region22: #{mymodel_forward.1} parent=1 // pred_check
      _
    $region23: #{mymodel_forward.1} parent=1 // pred_check_branch
      %92 = sbr.rel (0) target = $region25
    $region24: #{mymodel_forward.1} parent=1 // pred_region
      _
    $region25: #{mymodel_forward.1} parent=1 // pred_fallthru
      _
    // Predicated region
    $region26: #{mymodel_forward.1} parent=1 // pred_check
      _
    $region27: #{mymodel_forward.1} parent=1 // pred_check_branch
      %94 = sbr.rel (0) target = $region29
    $region28: #{mymodel_forward.1} parent=1 // pred_region
      _
    $region29: #{mymodel_forward.1} parent=1 // pred_fallthru
      _
    %95 = vsyncpa [#allocation3], 1
    %96 = vsyncpa [#allocation5], 1

</llo_original>
